<compile_context>
chip_gen: v6e
topology: v6e:2x2x1
jax: 0.10.0
libtpu: 0.0.40
codegen_flags: <defaults>
</compile_context>

<pallas_src>
import jax
import jax.numpy as jnp
from jax import lax
from jax.experimental import pallas as pl
from jax.experimental.pallas import tpu as pltpu

BN_EPS = 1e-5


def _conv_stats_kernel(x_ref, w_ref, conv_ref, stats_ref):
    """One deep-K MXU matmul per (TN, TC) tile + fused per-channel sum/sumsq."""
    n = pl.program_id(1)

    # (TN, K) @ (K, TC) -> (TN, TC), f32 accumulation on the MXU.
    acc = jnp.dot(x_ref[...], w_ref[...], preferred_element_type=jnp.float32)
    conv_ref[...] = acc

    # BN partial statistics, fused so the accumulator is only consumed once
    # right after it is produced (no full-N re-streaming).
    s = jnp.sum(acc, axis=0, keepdims=True)            # (1, TC)
    ss = jnp.sum(acc * acc, axis=0, keepdims=True)     # (1, TC)
    part = jnp.concatenate([s, ss], axis=0)            # (2, TC)

    @pl.when(n == 0)
    def _():
        stats_ref[...] = part

    @pl.when(n != 0)
    def _():
        stats_ref[...] = stats_ref[...] + part


def _bn_relu_kernel(conv_ref, scale_ref, shift_ref, o_ref):
    """Elementwise BN affine + ReLU on lane-dense (TN, TC) tiles."""
    o_ref[...] = jnp.maximum(conv_ref[...] * scale_ref[...] + shift_ref[...], 0.0)


def conv_bn_relu_forward(x_nchw, weight_oihw, gamma, beta, *,
                         stride=1, padding=0, dilation=1,
                         channel_tile=128, row_tile=256, use_bf16=False):
    """ConvBNReLU forward. x_nchw: (B, Cin, H, W) float32 (PyTorch layout)."""
    assert stride == 1 and dilation == 1, "only stride=1, dilation=1 supported"
    B, Cin, H, W = x_nchw.shape
    Cout, Cin2, kh, kw = weight_oihw.shape
    assert Cin2 == Cin and kh == kw
    k, p = kh, padding
    Hout = H + 2 * p - k + 1
    Wout = W + 2 * p - k + 1
    N = B * Hout * Wout
    K = k * k * Cin

    TC = min(channel_tile, Cout)
    assert Cout % TC == 0, "out_planes must be a multiple of the channel tile"
    TN = N
    for cand in (row_tile, 256, 128, 64, 32, 16, 8):
        if cand <= N and N % cand == 0:
            TN = cand
            break

    # ---- wrapper-side layout plumbing (XLA): im2col + weight reshape --------
    x_nhwc = jnp.transpose(x_nchw, (0, 2, 3, 1)).astype(jnp.float32)
    xpad = jnp.pad(x_nhwc, ((0, 0), (p, p), (p, p), (0, 0))) if p > 0 else x_nhwc
    cols = [xpad[:, di:di + Hout, dj:dj + Wout, :]
            for di in range(k) for dj in range(k)]
    xcol = jnp.concatenate(cols, axis=-1).reshape(N, K)            # (N, k*k*Cin)
    w2 = jnp.transpose(weight_oihw, (2, 3, 1, 0)).reshape(K, Cout) # matches col order
    w2 = w2.astype(jnp.float32)

    if use_bf16:  # optional v6e/v7x MXU-rate path (f32 accumulation kept)
        xcol = xcol.astype(jnp.bfloat16)
        w2 = w2.astype(jnp.bfloat16)

    # ---- pass 1: conv (deep-K matmul) + per-channel sum / sumsq -------------
    conv_flat, stats = pl.pallas_call(
        _conv_stats_kernel,
        out_shape=(jax.ShapeDtypeStruct((N, Cout), jnp.float32),
                   jax.ShapeDtypeStruct((2, Cout), jnp.float32)),
        grid_spec=pltpu.PrefetchScalarGridSpec(
            num_scalar_prefetch=0,
            grid=(Cout // TC, N // TN),                      # (parallel, arbitrary)
            in_specs=[
                pl.BlockSpec((TN, K), lambda c, n: (n, 0)),  # im2col row tile
                pl.BlockSpec((K, TC), lambda c, n: (0, c)),  # weight channel tile
            ],
            out_specs=[
                pl.BlockSpec((TN, TC), lambda c, n: (n, c)),  # conv tile (streamed)
                pl.BlockSpec((2, TC), lambda c, n: (0, c)),   # stats (resident acc)
            ],
        ),
        compiler_params=pltpu.CompilerParams(
            dimension_semantics=("parallel", "arbitrary"),
            vmem_limit_bytes=48 * 1024 * 1024,
        ),
        cost_estimate=pl.CostEstimate(
            flops=2 * N * Cout * K,
            transcendentals=0,
            bytes_accessed=4 * (N * K * (Cout // TC) + K * Cout + N * Cout + 2 * Cout),
        ),
    )(xcol, w2)

    # ---- tiny per-channel BN finalize in the wrapper -------------------------
    inv_n = 1.0 / float(N)
    mean = stats[0] * inv_n
    var = jnp.maximum(stats[1] * inv_n - mean * mean, 0.0)
    scale = gamma.astype(jnp.float32) * lax.rsqrt(var + BN_EPS)
    shift = beta.astype(jnp.float32) - mean * scale
    scale2 = scale.reshape(1, Cout)
    shift2 = shift.reshape(1, Cout)

    # ---- pass 2: normalize + ReLU (elementwise, lane-dense tiles) ------------
    y_flat = pl.pallas_call(
        _bn_relu_kernel,
        out_shape=jax.ShapeDtypeStruct((N, Cout), jnp.float32),
        grid_spec=pltpu.PrefetchScalarGridSpec(
            num_scalar_prefetch=0,
            grid=(N // TN, Cout // TC),
            in_specs=[
                pl.BlockSpec((TN, TC), lambda n, c: (n, c)),
                pl.BlockSpec((1, TC), lambda n, c: (0, c)),
                pl.BlockSpec((1, TC), lambda n, c: (0, c)),
            ],
            out_specs=pl.BlockSpec((TN, TC), lambda n, c: (n, c)),
        ),
        compiler_params=pltpu.CompilerParams(
            dimension_semantics=("parallel", "parallel"),
            vmem_limit_bytes=48 * 1024 * 1024,
        ),
        cost_estimate=pl.CostEstimate(
            flops=2 * N * Cout,
            transcendentals=0,
            bytes_accessed=4 * (2 * N * Cout + 2 * Cout),
        ),
    )(conv_flat, scale2, shift2)

    out = y_flat.reshape(B, Hout, Wout, Cout)
    return jnp.transpose(out, (0, 3, 1, 2))   # back to NCHW


def conv_bn_relu_reference(x, weight, gamma, beta, *,
                           stride=1, padding=0, dilation=1):
    """Pure-JAX reference of the PyTorch forward (NCHW, training-mode BN)."""
    conv = lax.conv_general_dilated(
        x, weight, window_strides=(stride, stride),
        padding=[(padding, padding), (padding, padding)],
        rhs_dilation=(dilation, dilation),
        dimension_numbers=('NCHW', 'OIHW', 'NCHW'),
        precision=lax.Precision.HIGHEST)
    mean = jnp.mean(conv, axis=(0, 2, 3), keepdims=True)
    var = jnp.mean((conv - mean) ** 2, axis=(0, 2, 3), keepdims=True)
    g = gamma.reshape(1, -1, 1, 1)
    b = beta.reshape(1, -1, 1, 1)
    y = (conv - mean) * lax.rsqrt(var + BN_EPS) * g + b
    return jnp.maximum(y, 0.0)


if __name__ == "__main__":
    B, CIN, H, W = 2, 32, 16, 16
    COUT, K, PAD = 256, 3, 1     # 2 channel tiles of 128, 2 row tiles of 256

    key = jax.random.PRNGKey(0)
    kx, kwt, kg, kb = jax.random.split(key, 4)

    x = jax.random.normal(kx, (B, CIN, H, W), jnp.float32)
    weight = (jax.random.normal(kwt, (COUT, CIN, K, K), jnp.float32)
              / jnp.sqrt(float(CIN * K * K)))
    gamma = 1.0 + 0.1 * jax.random.normal(kg, (COUT,), jnp.float32)
    beta = 0.1 * jax.random.normal(kb, (COUT,), jnp.float32)

    out = jax.block_until_ready(
        conv_bn_relu_forward(x, weight, gamma, beta, padding=PAD))
    ref = jax.block_until_ready(
        conv_bn_relu_reference(x, weight, gamma, beta, padding=PAD))

    assert out.shape == (B, COUT, H, W), out.shape
    max_err = float(jnp.max(jnp.abs(out - ref)))
    assert max_err < 2e-3, f"kernel/reference mismatch: max abs err = {max_err}"
    print("KERNEL_OK")
</pallas_src>

<mosaic_0001>
module attributes {stable_mosaic.version = 11 : i64} {
  func.func @_conv_stats_kernel(%arg0: i32, %arg1: i32, %arg2: memref<256x288xf32, #tpu.memory_space<vmem>>, %arg3: memref<288x128xf32, #tpu.memory_space<vmem>>, %arg4: memref<256x128xf32, #tpu.memory_space<vmem>>, %arg5: memref<2x128xf32, #tpu.memory_space<vmem>>) attributes {dimension_semantics = [#tpu.dimension_semantics<parallel>, #tpu.dimension_semantics<arbitrary>], iteration_bounds = array<i64: 2, 2>, scalar_prefetch = 0 : i64, scratch_operands = 0 : i64, tpu.core_type = #tpu.core_type<tc>, window_params = [{transform_indices = @transform_0, window_bounds = array<i64: 256, 288>}, {transform_indices = @transform_1, window_bounds = array<i64: 288, 128>}, {transform_indices = @transform_2, window_bounds = array<i64: 256, 128>}, {transform_indices = @transform_3, window_bounds = array<i64: 2, 128>}]} {
    %c0 = arith.constant 0 : index
    %c0_0 = arith.constant 0 : index
    %0 = vector.load %arg2[%c0, %c0_0] : memref<256x288xf32, #tpu.memory_space<vmem>>, vector<256x288xf32>
    %c0_1 = arith.constant 0 : index
    %c0_2 = arith.constant 0 : index
    %1 = vector.load %arg3[%c0_1, %c0_2] : memref<288x128xf32, #tpu.memory_space<vmem>>, vector<288x128xf32>
    %cst = arith.constant dense<0.000000e+00> : vector<256x128xf32>
    %2 = tpu.matmul %0, %1, %cst {dimension_numbers = #tpu.dot_dimension_numbers<[1], [0], [0], [1], [0, 0, 1, 1], [], []>} : vector<256x288xf32>, vector<288x128xf32>, vector<256x128xf32> -> vector<256x128xf32>
    %c0_3 = arith.constant 0 : index
    %c0_4 = arith.constant 0 : index
    %3 = vector.load %arg4[%c0_3, %c0_4] : memref<256x128xf32, #tpu.memory_space<vmem>>, vector<256x128xf32>
    tpu.vector_store %arg4[%c0_3, %c0_4], %2 {strides = array<i32>} : memref<256x128xf32, #tpu.memory_space<vmem>>, vector<256x128xf32>,
    %cst_5 = arith.constant dense<0.000000e+00> : vector<128xf32>
    %4 = vector.multi_reduction <add>, %2, %cst_5 [0] : vector<256x128xf32> to vector<128xf32>
    %5 = vector.shape_cast %4 : vector<128xf32> to vector<1x128xf32>
    %6 = arith.mulf %2, %2 : vector<256x128xf32>
    %cst_6 = arith.constant dense<0.000000e+00> : vector<128xf32>
    %7 = vector.multi_reduction <add>, %6, %cst_6 [0] : vector<256x128xf32> to vector<128xf32>
    %8 = vector.shape_cast %7 : vector<128xf32> to vector<1x128xf32>
    %9 = tpu.concatenate %5, %8 in 0 : vector<1x128xf32>, vector<1x128xf32> -> vector<2x128xf32>
    %c0_i32 = arith.constant 0 : i32
    %10 = arith.cmpi eq, %arg1, %c0_i32 : i32
    %11 = arith.extui %10 : i1 to i32
    %c0_i32_7 = arith.constant 0 : i32
    %12 = arith.cmpi ne, %11, %c0_i32_7 : i32
    scf.if %12 {
      %c0_10 = arith.constant 0 : index
      %c0_11 = arith.constant 0 : index
      %16 = vector.load %arg5[%c0_10, %c0_11] : memref<2x128xf32, #tpu.memory_space<vmem>>, vector<2x128xf32>
      tpu.vector_store %arg5[%c0_10, %c0_11], %9 {strides = array<i32>} : memref<2x128xf32, #tpu.memory_space<vmem>>, vector<2x128xf32>,
    } else {
    }
    %c0_i32_8 = arith.constant 0 : i32
    %13 = arith.cmpi ne, %arg1, %c0_i32_8 : i32
    %14 = arith.extui %13 : i1 to i32
    %c0_i32_9 = arith.constant 0 : i32
    %15 = arith.cmpi ne, %14, %c0_i32_9 : i32
    scf.if %15 {
      %c0_10 = arith.constant 0 : index
      %c0_11 = arith.constant 0 : index
      %16 = vector.load %arg5[%c0_10, %c0_11] : memref<2x128xf32, #tpu.memory_space<vmem>>, vector<2x128xf32>
      %17 = arith.addf %16, %9 : vector<2x128xf32>
      %c0_12 = arith.constant 0 : index
      %c0_13 = arith.constant 0 : index
      %18 = vector.load %arg5[%c0_12, %c0_13] : memref<2x128xf32, #tpu.memory_space<vmem>>, vector<2x128xf32>
      tpu.vector_store %arg5[%c0_12, %c0_13], %17 {strides = array<i32>} : memref<2x128xf32, #tpu.memory_space<vmem>>, vector<2x128xf32>,
    } else {
    }
    return
  }
  func.func @transform_0(%arg0: i32, %arg1: i32) -> (i32, i32) {
    %c0_i32 = arith.constant 0 : i32
    %c0_i32_0 = arith.constant 0 : i32
    return %arg1, %c0_i32 : i32, i32
  }
  func.func @transform_1(%arg0: i32, %arg1: i32) -> (i32, i32) {
    %c0_i32 = arith.constant 0 : i32
    %c0_i32_0 = arith.constant 0 : i32
    return %c0_i32, %arg0 : i32, i32
  }
  func.func @transform_2(%arg0: i32, %arg1: i32) -> (i32, i32) {
    %c0_i32 = arith.constant 0 : i32
    return %arg1, %arg0 : i32, i32
  }
  func.func @transform_3(%arg0: i32, %arg1: i32) -> (i32, i32) {
    %c0_i32 = arith.constant 0 : i32
    %c0_i32_0 = arith.constant 0 : i32
    return %c0_i32, %arg0 : i32, i32
  }
}

</mosaic_0001>

<llo_original>
// kernel: tpu_custom_call.1
$region0: #{tpu_custom_call.1}
  #allocation0 [shape = 'u32[]', space=smem, size = 0x4, offset = 0x4, fixed_abs, tag = 'smem constant byte address 0x4 - core index']
  #allocation1 [shape = 'u32[144,128]{1,0:T(1,128)}', space=vmem, size = 0x12000, scoped, tag = 'internal scratch']
  %s0 = inlined_call_operand.vmem [shape: f32[512,288], index: 0, kind: input, shape index: {}]
  %s1 = inlined_call_operand.vmem [shape: f32[288,256], index: 1, kind: input, shape index: {}]
  %s2 = inlined_call_operand.hbm [shape: f32[512,256], index: 2, kind: output, shape index: {0}]
  %s3 = inlined_call_operand.hbm [shape: f32[2,256], index: 3, kind: output, shape index: {1}]
  %4 = xla_tuple %s2, %s3
  %s5 = sld [smem:[#allocation0]]
  $region95: #{tpu_custom_call.1} parent=0
    _
  %s7 = ssub.s32 1, %s5
  %s8 = scalar_select 0, %s7, %s5
  $region1: #{tpu_custom_call.1} parent=0
    #allocation2 [shape = 'u8[294912]{0}', space=vmem, size = 0x48000, scoped, tag = 'input window, operand 1']
    #allocation3 [shape = 'u8[262144]{0}', space=vmem, size = 0x40000, scoped, tag = 'output window, operand 0']
    #allocation4 [shape = 's32[2]{0}', space=sflag, size = 0x8, scoped, tag = 'scoped memory for tpu_custom_call.1']
    #allocation5 [shape = 'u8[2048]{0}', space=vmem, size = 0x800, scoped, tag = 'output window, operand 1']
    #allocation6 [shape = 's32[2]{0}', space=sflag, size = 0x8, scoped, tag = 'scoped memory for tpu_custom_call.1']
    %9 = vsyncpa [#allocation4], 0
    %s10 = scalar_lea.sflag [#allocation4], 1
    %11 = vsyncpa %s10, 0
    %12 = vsyncpa [#allocation6], 0
    %s13 = scalar_lea.sflag [#allocation6], 1
    %14 = vsyncpa %s13, 0
    loop: start=0, step=1, limit=6
    $region2: #{tpu_custom_call.1} parent=1 // loop_pre_header
      _
    $region3: #{tpu_custom_call.1} parent=1 // loop_header
      %s16 = sphi 0, %s20
      %p17 = scmp.ge.s32.totalorder %s16, 6
      %s23 = sphi 0, %s35
      %s24 = sphi 0, %s31
      %s25 = sphi 0, %s23
      %s26 = sphi 0, %s24
      %s27 = sphi 0, %s25
      %s28 = sphi 0, %s26
      %s38 = sphi 0, %s40
      %s41 = sphi 0, %s38
      %s42 = sphi 0, %s41
      %s58 = sphi 0, %s42
      %s64 = sphi 0, %s66
      %s67 = sphi 0, %s64
      %s68 = sphi 0, %s67
      %s84 = sphi 0, %s68
      %s92 = sphi 0, %s94
      %s95 = sphi 0, %s92
      %s96 = sphi 0, %s95
      %s112 = sphi 0, %s96
      %s118 = sphi 0, %s120
      %s121 = sphi 0, %s118
      %s122 = sphi 0, %s121
      %s138 = sphi 0, %s122
    $region4: #{tpu_custom_call.1} parent=1 // loop_header_branch
      %19 = sbr.rel (%p17) target = $region8
    $region5: #{tpu_custom_call.1} parent=1 // loop_body
      %s21 = ssub.s32 %s16, 1
      %s22 = ssub.s32 %s16, 2
      %s29 = sadd.s32 1, %s24
      %p30 = scmp.ge.s32.totalorder %s29, 2
      %s31 = scalar_select %p30, 0, %s29
      %s32 = sadd.s32 1, %s23
      %s33 = scalar_select %p30, %s32, %s23
      %p34 = scmp.ge.s32.totalorder %s33, 2
      %s35 = scalar_select %p34, 0, %s33
      %s36 = ssub.s32 %s24, %s31
      %p37 = scmp.eq.s32.totalorder %s36, 0
      %s39 = sadd.s32 %s38, 1
      %s40 = scalar_select %p37, %s38, %s39
      %p43 = pneg %p37
      %p44 = scmp.eq.s32.totalorder %s16, 3
      %p45 = por %p43, %p44
      %p46 = scmp.ne.s32.totalorder %s38, %s41
      %p47 = scmp.eq.s32.totalorder %s16, 0
      %p48 = por %p46, %p47
      %p49 = scmp.ne.s32.totalorder %s38, %s41
      %p50 = scmp.eq.s32.totalorder %s21, 3
      %p51 = por %p49, %p50
      %p52 = scmp.ne.s32.totalorder %s41, %s42
      %p53 = scmp.eq.s32.totalorder %s21, 0
      %p54 = por %p52, %p53
      %p55 = scmp.ne.s32.totalorder %s41, %s42
      %p56 = scmp.eq.s32.totalorder %s22, 3
      %p57 = por %p55, %p56
      %p59 = scmp.ne.s32.totalorder %s42, %s58
      %p60 = scmp.eq.s32.totalorder %s22, 0
      %p61 = por %p59, %p60
      %s62 = ssub.s32 %s23, %s35
      %p63 = scmp.eq.s32.totalorder %s62, 0
      %s65 = sadd.s32 %s64, 1
      %s66 = scalar_select %p63, %s64, %s65
      %p69 = pneg %p63
      %p70 = scmp.eq.s32.totalorder %s16, 3
      %p71 = por %p69, %p70
      %p72 = scmp.ne.s32.totalorder %s64, %s67
      %p73 = scmp.eq.s32.totalorder %s16, 0
      %p74 = por %p72, %p73
      %p75 = scmp.ne.s32.totalorder %s64, %s67
      %p76 = scmp.eq.s32.totalorder %s21, 3
      %p77 = por %p75, %p76
      %p78 = scmp.ne.s32.totalorder %s67, %s68
      %p79 = scmp.eq.s32.totalorder %s21, 0
      %p80 = por %p78, %p79
      %p81 = scmp.ne.s32.totalorder %s67, %s68
      %p82 = scmp.eq.s32.totalorder %s22, 3
      %p83 = por %p81, %p82
      %p85 = scmp.ne.s32.totalorder %s68, %s84
      %p86 = scmp.eq.s32.totalorder %s22, 0
      %p87 = por %p85, %p86
      %s88 = ssub.s32 %s24, %s31
      %s89 = ssub.s32 %s23, %s35
      %s90 = sor.u32 %s88, %s89
      %p91 = scmp.eq.s32.totalorder %s90, 0
      %s93 = sadd.s32 %s92, 1
      %s94 = scalar_select %p91, %s92, %s93
      %p97 = pneg %p91
      %p98 = scmp.eq.s32.totalorder %s16, 3
      %p99 = por %p97, %p98
      %p100 = scmp.ne.s32.totalorder %s92, %s95
      %p101 = scmp.eq.s32.totalorder %s16, 0
      %p102 = por %p100, %p101
      %p103 = scmp.ne.s32.totalorder %s92, %s95
      %p104 = scmp.eq.s32.totalorder %s21, 3
      %p105 = por %p103, %p104
      %p106 = scmp.ne.s32.totalorder %s95, %s96
      %p107 = scmp.eq.s32.totalorder %s21, 0
      %p108 = por %p106, %p107
      %p109 = scmp.ne.s32.totalorder %s95, %s96
      %p110 = scmp.eq.s32.totalorder %s22, 3
      %p111 = por %p109, %p110
      %p113 = scmp.ne.s32.totalorder %s96, %s112
      %p114 = scmp.eq.s32.totalorder %s22, 0
      %p115 = por %p113, %p114
      %s116 = ssub.s32 %s23, %s35
      %p117 = scmp.eq.s32.totalorder %s116, 0
      %s119 = sadd.s32 %s118, 1
      %s120 = scalar_select %p117, %s118, %s119
      %p123 = pneg %p117
      %p124 = scmp.eq.s32.totalorder %s16, 3
      %p125 = por %p123, %p124
      %p126 = scmp.ne.s32.totalorder %s118, %s121
      %p127 = scmp.eq.s32.totalorder %s16, 0
      %p128 = por %p126, %p127
      %p129 = scmp.ne.s32.totalorder %s118, %s121
      %p130 = scmp.eq.s32.totalorder %s21, 3
      %p131 = por %p129, %p130
      %p132 = scmp.ne.s32.totalorder %s121, %s122
      %p133 = scmp.eq.s32.totalorder %s21, 0
      %p134 = por %p132, %p133
      %p135 = scmp.ne.s32.totalorder %s121, %s122
      %p136 = scmp.eq.s32.totalorder %s22, 3
      %p137 = por %p135, %p136
      %p139 = scmp.ne.s32.totalorder %s122, %s138
      %p140 = scmp.eq.s32.totalorder %s22, 0
      %p141 = por %p139, %p140
      %p142 = scmp.le.s32.totalorder 1, %s16
      %p143 = scmp.lt.s32.totalorder %s16, 5
      %p144 = pnand %p142, %p143
      %p145 = pneg %p144
      // Predicated region
      $region9: #{tpu_custom_call.1} parent=5 // pred_check
        _
      $region10: #{tpu_custom_call.1} parent=5 // pred_check_branch
        %147 = sbr.rel (%p144) target = $region12
      $region11: #{tpu_custom_call.1} parent=5 // pred_region
        %s148 = ssub.s32 %s16, 1
      $region12: #{tpu_custom_call.1} parent=5 // pred_fallthru
        _
      %p149 = scmp.lt.s32.totalorder %s16, 4
      // Predicated region
      $region13: #{tpu_custom_call.1} parent=5 // pred_check
        %p150 = pneg %p149
      $region14: #{tpu_custom_call.1} parent=5 // pred_check_branch
        %152 = sbr.rel (%p150) target = $region16
      $region15: #{tpu_custom_call.1} parent=5 // pred_region
        // Predicated region
        $region17: #{tpu_custom_call.1} parent=15 // pred_check
          %p153 = pneg %p48
        $region18: #{tpu_custom_call.1} parent=15 // pred_check_branch
          %155 = sbr.rel (%p153) target = $region20
        $region19: #{tpu_custom_call.1} parent=15 // pred_region
          %s156 = smul.u32 32, %s24
          %p157 = scmp.lt.s32.totalorder %s156, 63
          %s158 = scalar_select %p157, %s156, 63
          %s159 = smul.addr %s158, 3
          %s160 = smul.addr %s159, 8
          %s161 = scalar_lea.vmem %s0, %s160
          %s162 = smul.u32 32, %s24
        $region20: #{tpu_custom_call.1} parent=15 // pred_fallthru
          _
        // Predicated region
        $region21: #{tpu_custom_call.1} parent=15 // pred_check
          %p163 = pneg %p74
        $region22: #{tpu_custom_call.1} parent=15 // pred_check_branch
          %165 = sbr.rel (%p163) target = $region24
        $region23: #{tpu_custom_call.1} parent=15 // pred_region
          %s166 = sand.u32 %s64, 1
          %s167 = sand.u32 %s64, 1
          %s168 = smul.addr %s167, 288
          %s169 = scalar_lea.vmem [#allocation2], %s168
          %s170 = smul.addr %s23, 8
          %s171 = scalar_lea.vmem %s1, %s170
          // Predicated region
          $region25: #{tpu_custom_call.1} parent=23 // pred_check
            _
          $region26: #{tpu_custom_call.1} parent=23 // pred_check_branch
            %173 = sbr.rel (0) target = $region28
          $region27: #{tpu_custom_call.1} parent=23 // pred_region
            // Predicated region
            $region29: #{tpu_custom_call.1} parent=27 // pred_check
              _
            $region30: #{tpu_custom_call.1} parent=27 // pred_check_branch
              %175 = sbr.rel (0) target = $region32
            $region31: #{tpu_custom_call.1} parent=27 // pred_region
              // Predicated region
              $region44: #{tpu_custom_call.1} parent=31 // pred_check
                _
              $region45: #{tpu_custom_call.1} parent=31 // pred_check_branch
                %261 = sbr.rel (0) target = $region47
              $region46: #{tpu_custom_call.1} parent=31 // pred_region
                loop: start=0, step=1, limit=1
                $region48: #{tpu_custom_call.1} parent=46 // loop_pre_header
                  _
                $region49: #{tpu_custom_call.1} parent=46 // loop_header
                  %s263 = sphi 0, %s267
                  %p264 = scmp.ge.s32.totalorder %s263, 1
                  %s268 = sphi %s171, %s171
                  %s269 = sphi %s169, %s169
                $region50: #{tpu_custom_call.1} parent=46 // loop_header_branch
                  %266 = sbr.rel (%p264) target = $region54
                $region51: #{tpu_custom_call.1} parent=46 // loop_body
                  %v270 = vld [vmem:[%s268] sm:$0xff]
                  %271 = vst [vmem:[%s269] sm:$0xff] %v270
                  %v272 = vld [vmem:[%s268 + $0x10] sm:$0xff]
                  %273 = vst [vmem:[%s269 + $0x8] sm:$0xff] %v272
                  %v274 = vld [vmem:[%s268 + $0x20] sm:$0xff]
                  %275 = vst [vmem:[%s269 + $0x10] sm:$0xff] %v274
                  %v276 = vld [vmem:[%s268 + $0x30] sm:$0xff]
                  %277 = vst [vmem:[%s269 + $0x18] sm:$0xff] %v276
                  %v278 = vld [vmem:[%s268 + $0x40] sm:$0xff]
                  %279 = vst [vmem:[%s269 + $0x20] sm:$0xff] %v278
                  %v280 = vld [vmem:[%s268 + $0x50] sm:$0xff]
                  %281 = vst [vmem:[%s269 + $0x28] sm:$0xff] %v280
                  %v282 = vld [vmem:[%s268 + $0x60] sm:$0xff]
                  %283 = vst [vmem:[%s269 + $0x30] sm:$0xff] %v282
                  %v284 = vld [vmem:[%s268 + $0x70] sm:$0xff]
                  %285 = vst [vmem:[%s269 + $0x38] sm:$0xff] %v284
                  %v286 = vld [vmem:[%s268 + $0x80] sm:$0xff]
                  %287 = vst [vmem:[%s269 + $0x40] sm:$0xff] %v286
                  %v288 = vld [vmem:[%s268 + $0x90] sm:$0xff]
                  %289 = vst [vmem:[%s269 + $0x48] sm:$0xff] %v288
                  %v290 = vld [vmem:[%s268 + $0xa0] sm:$0xff]
                  %291 = vst [vmem:[%s269 + $0x50] sm:$0xff] %v290
                  %v292 = vld [vmem:[%s268 + $0xb0] sm:$0xff]
                  %293 = vst [vmem:[%s269 + $0x58] sm:$0xff] %v292
                  %v294 = vld [vmem:[%s268 + $0xc0] sm:$0xff]
                  %295 = vst [vmem:[%s269 + $0x60] sm:$0xff] %v294
                  %v296 = vld [vmem:[%s268 + $0xd0] sm:$0xff]
                  %297 = vst [vmem:[%s269 + $0x68] sm:$0xff] %v296
                  %v298 = vld [vmem:[%s268 + $0xe0] sm:$0xff]
                  %299 = vst [vmem:[%s269 + $0x70] sm:$0xff] %v298
                  %v300 = vld [vmem:[%s268 + $0xf0] sm:$0xff]
                  %301 = vst [vmem:[%s269 + $0x78] sm:$0xff] %v300
                  %v302 = vld [vmem:[%s268 + $0x100] sm:$0xff]
                  %303 = vst [vmem:[%s269 + $0x80] sm:$0xff] %v302
                  %v304 = vld [vmem:[%s268 + $0x110] sm:$0xff]
                  %305 = vst [vmem:[%s269 + $0x88] sm:$0xff] %v304
                  %v306 = vld [vmem:[%s268 + $0x120] sm:$0xff]
                  %307 = vst [vmem:[%s269 + $0x90] sm:$0xff] %v306
                  %v308 = vld [vmem:[%s268 + $0x130] sm:$0xff]
                  %309 = vst [vmem:[%s269 + $0x98] sm:$0xff] %v308
                  %v310 = vld [vmem:[%s268 + $0x140] sm:$0xff]
                  %311 = vst [vmem:[%s269 + $0xa0] sm:$0xff] %v310
                  %v312 = vld [vmem:[%s268 + $0x150] sm:$0xff]
                  %313 = vst [vmem:[%s269 + $0xa8] sm:$0xff] %v312
                  %v314 = vld [vmem:[%s268 + $0x160] sm:$0xff]
                  %315 = vst [vmem:[%s269 + $0xb0] sm:$0xff] %v314
                  %v316 = vld [vmem:[%s268 + $0x170] sm:$0xff]
                  %317 = vst [vmem:[%s269 + $0xb8] sm:$0xff] %v316
                  %v318 = vld [vmem:[%s268 + $0x180] sm:$0xff]
                  %319 = vst [vmem:[%s269 + $0xc0] sm:$0xff] %v318
                  %v320 = vld [vmem:[%s268 + $0x190] sm:$0xff]
                  %321 = vst [vmem:[%s269 + $0xc8] sm:$0xff] %v320
                  %v322 = vld [vmem:[%s268 + $0x1a0] sm:$0xff]
                  %323 = vst [vmem:[%s269 + $0xd0] sm:$0xff] %v322
                  %v324 = vld [vmem:[%s268 + $0x1b0] sm:$0xff]
                  %325 = vst [vmem:[%s269 + $0xd8] sm:$0xff] %v324
                  %v326 = vld [vmem:[%s268 + $0x1c0] sm:$0xff]
                  %327 = vst [vmem:[%s269 + $0xe0] sm:$0xff] %v326
                  %v328 = vld [vmem:[%s268 + $0x1d0] sm:$0xff]
                  %329 = vst [vmem:[%s269 + $0xe8] sm:$0xff] %v328
                  %v330 = vld [vmem:[%s268 + $0x1e0] sm:$0xff]
                  %331 = vst [vmem:[%s269 + $0xf0] sm:$0xff] %v330
                  %v332 = vld [vmem:[%s268 + $0x1f0] sm:$0xff]
                  %333 = vst [vmem:[%s269 + $0xf8] sm:$0xff] %v332
                  %v334 = vld [vmem:[%s268 + $0x200] sm:$0xff]
                  %335 = vst [vmem:[%s269 + $0x100] sm:$0xff] %v334
                  %v336 = vld [vmem:[%s268 + $0x210] sm:$0xff]
                  %337 = vst [vmem:[%s269 + $0x108] sm:$0xff] %v336
                  %v338 = vld [vmem:[%s268 + $0x220] sm:$0xff]
                  %339 = vst [vmem:[%s269 + $0x110] sm:$0xff] %v338
                  %v340 = vld [vmem:[%s268 + $0x230] sm:$0xff]
                  %341 = vst [vmem:[%s269 + $0x118] sm:$0xff] %v340
                $region52: #{tpu_custom_call.1} parent=46 // loop_footer
                  %s267 = sadd.s32 1, %s263
                $region53: #{tpu_custom_call.1} parent=46 // loop_footer_branch
                  %262 = sbr.rel target = $region49
                $region54: #{tpu_custom_call.1} parent=46 // loop_exit
                  _
              $region47: #{tpu_custom_call.1} parent=31 // pred_fallthru
                _
              // Predicated region
              $region55: #{tpu_custom_call.1} parent=31 // pred_check
                _
              $region56: #{tpu_custom_call.1} parent=31 // pred_check_branch
                %343 = sbr.rel target = $region58
              $region57: #{tpu_custom_call.1} parent=31 // pred_region
                _
              $region58: #{tpu_custom_call.1} parent=31 // pred_fallthru
                _
            $region32: #{tpu_custom_call.1} parent=27 // pred_fallthru
              _
            // Predicated region
            $region33: #{tpu_custom_call.1} parent=27 // pred_check
              _
            $region34: #{tpu_custom_call.1} parent=27 // pred_check_branch
              %177 = sbr.rel target = $region36
            $region35: #{tpu_custom_call.1} parent=27 // pred_region
              %s179 = ssub.s32 256, 1
              loop: start=0, step=1, limit=1
              $region37: #{tpu_custom_call.1} parent=35 // loop_pre_header
                _
              $region38: #{tpu_custom_call.1} parent=35 // loop_header
                %s181 = sphi 0, %s185
                %p182 = scmp.ge.s32.totalorder %s181, 1
                %s186 = sphi %s171, %s171
                %s187 = sphi %s169, %s169
              $region39: #{tpu_custom_call.1} parent=35 // loop_header_branch
                %184 = sbr.rel (%p182) target = $region43
              $region40: #{tpu_custom_call.1} parent=35 // loop_body
                %v188 = vld [vmem:[%s186] sm:%s179]
                %189 = vst [vmem:[%s187] sm:%s179] %v188
                %v190 = vld [vmem:[%s186 + $0x10] sm:%s179]
                %191 = vst [vmem:[%s187 + $0x8] sm:%s179] %v190
                %v192 = vld [vmem:[%s186 + $0x20] sm:%s179]
                %193 = vst [vmem:[%s187 + $0x10] sm:%s179] %v192
                %v194 = vld [vmem:[%s186 + $0x30] sm:%s179]
                %195 = vst [vmem:[%s187 + $0x18] sm:%s179] %v194
                %v196 = vld [vmem:[%s186 + $0x40] sm:%s179]
                %197 = vst [vmem:[%s187 + $0x20] sm:%s179] %v196
                %v198 = vld [vmem:[%s186 + $0x50] sm:%s179]
                %199 = vst [vmem:[%s187 + $0x28] sm:%s179] %v198
                %v200 = vld [vmem:[%s186 + $0x60] sm:%s179]
                %201 = vst [vmem:[%s187 + $0x30] sm:%s179] %v200
                %v202 = vld [vmem:[%s186 + $0x70] sm:%s179]
                %203 = vst [vmem:[%s187 + $0x38] sm:%s179] %v202
                %v204 = vld [vmem:[%s186 + $0x80] sm:%s179]
                %205 = vst [vmem:[%s187 + $0x40] sm:%s179] %v204
                %v206 = vld [vmem:[%s186 + $0x90] sm:%s179]
                %207 = vst [vmem:[%s187 + $0x48] sm:%s179] %v206
                %v208 = vld [vmem:[%s186 + $0xa0] sm:%s179]
                %209 = vst [vmem:[%s187 + $0x50] sm:%s179] %v208
                %v210 = vld [vmem:[%s186 + $0xb0] sm:%s179]
                %211 = vst [vmem:[%s187 + $0x58] sm:%s179] %v210
                %v212 = vld [vmem:[%s186 + $0xc0] sm:%s179]
                %213 = vst [vmem:[%s187 + $0x60] sm:%s179] %v212
                %v214 = vld [vmem:[%s186 + $0xd0] sm:%s179]
                %215 = vst [vmem:[%s187 + $0x68] sm:%s179] %v214
                %v216 = vld [vmem:[%s186 + $0xe0] sm:%s179]
                %217 = vst [vmem:[%s187 + $0x70] sm:%s179] %v216
                %v218 = vld [vmem:[%s186 + $0xf0] sm:%s179]
                %219 = vst [vmem:[%s187 + $0x78] sm:%s179] %v218
                %v220 = vld [vmem:[%s186 + $0x100] sm:%s179]
                %221 = vst [vmem:[%s187 + $0x80] sm:%s179] %v220
                %v222 = vld [vmem:[%s186 + $0x110] sm:%s179]
                %223 = vst [vmem:[%s187 + $0x88] sm:%s179] %v222
                %v224 = vld [vmem:[%s186 + $0x120] sm:%s179]
                %225 = vst [vmem:[%s187 + $0x90] sm:%s179] %v224
                %v226 = vld [vmem:[%s186 + $0x130] sm:%s179]
                %227 = vst [vmem:[%s187 + $0x98] sm:%s179] %v226
                %v228 = vld [vmem:[%s186 + $0x140] sm:%s179]
                %229 = vst [vmem:[%s187 + $0xa0] sm:%s179] %v228
                %v230 = vld [vmem:[%s186 + $0x150] sm:%s179]
                %231 = vst [vmem:[%s187 + $0xa8] sm:%s179] %v230
                %v232 = vld [vmem:[%s186 + $0x160] sm:%s179]
                %233 = vst [vmem:[%s187 + $0xb0] sm:%s179] %v232
                %v234 = vld [vmem:[%s186 + $0x170] sm:%s179]
                %235 = vst [vmem:[%s187 + $0xb8] sm:%s179] %v234
                %v236 = vld [vmem:[%s186 + $0x180] sm:%s179]
                %237 = vst [vmem:[%s187 + $0xc0] sm:%s179] %v236
                %v238 = vld [vmem:[%s186 + $0x190] sm:%s179]
                %239 = vst [vmem:[%s187 + $0xc8] sm:%s179] %v238
                %v240 = vld [vmem:[%s186 + $0x1a0] sm:%s179]
                %241 = vst [vmem:[%s187 + $0xd0] sm:%s179] %v240
                %v242 = vld [vmem:[%s186 + $0x1b0] sm:%s179]
                %243 = vst [vmem:[%s187 + $0xd8] sm:%s179] %v242
                %v244 = vld [vmem:[%s186 + $0x1c0] sm:%s179]
                %245 = vst [vmem:[%s187 + $0xe0] sm:%s179] %v244
                %v246 = vld [vmem:[%s186 + $0x1d0] sm:%s179]
                %247 = vst [vmem:[%s187 + $0xe8] sm:%s179] %v246
                %v248 = vld [vmem:[%s186 + $0x1e0] sm:%s179]
                %249 = vst [vmem:[%s187 + $0xf0] sm:%s179] %v248
                %v250 = vld [vmem:[%s186 + $0x1f0] sm:%s179]
                %251 = vst [vmem:[%s187 + $0xf8] sm:%s179] %v250
                %v252 = vld [vmem:[%s186 + $0x200] sm:%s179]
                %253 = vst [vmem:[%s187 + $0x100] sm:%s179] %v252
                %v254 = vld [vmem:[%s186 + $0x210] sm:%s179]
                %255 = vst [vmem:[%s187 + $0x108] sm:%s179] %v254
                %v256 = vld [vmem:[%s186 + $0x220] sm:%s179]
                %257 = vst [vmem:[%s187 + $0x110] sm:%s179] %v256
                %v258 = vld [vmem:[%s186 + $0x230] sm:%s179]
                %259 = vst [vmem:[%s187 + $0x118] sm:%s179] %v258
              $region41: #{tpu_custom_call.1} parent=35 // loop_footer
                %s185 = sadd.s32 1, %s181
              $region42: #{tpu_custom_call.1} parent=35 // loop_footer_branch
                %180 = sbr.rel target = $region38
              $region43: #{tpu_custom_call.1} parent=35 // loop_exit
                _
            $region36: #{tpu_custom_call.1} parent=27 // pred_fallthru
              _
          $region28: #{tpu_custom_call.1} parent=23 // pred_fallthru
            _
          %344 = vnop
        $region24: #{tpu_custom_call.1} parent=15 // pred_fallthru
          _
      $region16: #{tpu_custom_call.1} parent=5 // pred_fallthru
        _
      %p345 = scmp.le.s32.totalorder 1, %s16
      %p346 = scmp.lt.s32.totalorder %s16, 5
      %p347 = pnand %p345, %p346
      %p348 = pneg %p347
      // Predicated region
      $region59: #{tpu_custom_call.1} parent=5 // pred_check
        _
      $region60: #{tpu_custom_call.1} parent=5 // pred_check_branch
        %350 = sbr.rel (%p347) target = $region62
      $region61: #{tpu_custom_call.1} parent=5 // pred_region
        %s351 = ssub.s32 %s16, 1
        %s352 = sand.u32 %s67, 1
        %s353 = sand.u32 %s67, 1
        %s354 = smul.addr %s353, 288
        %s355 = scalar_lea.vmem [#allocation2], %s354
        // Predicated region
        $region63: #{tpu_custom_call.1} parent=61 // pred_check
          %p356 = pneg %p80
        $region64: #{tpu_custom_call.1} parent=61 // pred_check_branch
          %358 = sbr.rel (%p356) target = $region66
        $region65: #{tpu_custom_call.1} parent=61 // pred_region
          _
        $region66: #{tpu_custom_call.1} parent=61 // pred_fallthru
          _
        %s359 = smul.u32 32, %s26
        %p360 = scmp.lt.s32.totalorder %s359, 63
        %s361 = scalar_select %p360, %s359, 63
        %s362 = smul.addr %s361, 3
        %s363 = smul.addr %s362, 8
        %s364 = scalar_lea.vmem %s0, %s363
        %p365 = pneg %p54
        %p366 = pneg %p51
        %s367 = sand.u32 %s67, 1
        %s368 = sand.u32 %s67, 1
        %s369 = smul.addr %s368, 288
        %s370 = scalar_lea.vmem [#allocation2], %s369
        %p371 = pneg %p80
        %p372 = pneg %p77
        %p373 = pneg %p108
        %p374 = pneg %p105
        %s375 = sand.u32 %s95, 1
        %s376 = scalar_lea.sflag [#allocation4], %s375
        %s377 = sand.u32 %s95, 1
        %s378 = smul.addr %s377, 256
        %s379 = scalar_lea.vmem [#allocation3], %s378
        %p380 = pneg %p134
        %p381 = pneg %p131
        %s382 = sand.u32 %s121, 1
        %s383 = scalar_lea.sflag [#allocation6], %s382
        %s384 = sand.u32 %s121, 1
        %s385 = smul.addr %s384, 2
        %s386 = scalar_lea.vmem [#allocation5], %s385
        %s387 = smul.u32 32, %s26
        %p388 = scmp.lt.s32.totalorder %s387, 63
        %s389 = scalar_select %p388, %s387, 63
        %s390 = smul.addr %s389, 3
        %s391 = smul.addr %s390, 8
        %s392 = scalar_lea.vmem %s0, %s391
        %s393 = smul.u32 32, %s26
        %s394 = smul.u32 32, %s26
        %v395 = vld [vmem:[%s392] sm:$0xff]
        %v396 = vld [vmem:[%s392 + $0x8] sm:$0xff]
        %v397 = vld [vmem:[%s392 + $0x10] sm:$0xff]
        %v398 = vld [vmem:[%s392 + $0x18] sm:$0xff]
        %v399 = vld [vmem:[%s392 + $0x20] sm:$0xff]
        %v400 = vld [vmem:[%s392 + $0x28] sm:$0xff]
        %v401 = vld [vmem:[%s392 + $0x30] sm:$0xff]
        %v402 = vld [vmem:[%s392 + $0x38] sm:$0xff]
        %v403 = vld [vmem:[%s392 + $0x40] sm:$0xff]
        %v404 = vld [vmem:[%s392 + $0x48] sm:$0xff]
        %v405 = vld [vmem:[%s392 + $0x50] sm:$0xff]
        %v406 = vld [vmem:[%s392 + $0x58] sm:$0xff]
        %v407 = vld [vmem:[%s392 + $0x60] sm:$0xff]
        %v408 = vld [vmem:[%s392 + $0x68] sm:$0xff]
        %v409 = vld [vmem:[%s392 + $0x70] sm:$0xff]
        %v410 = vld [vmem:[%s392 + $0x78] sm:$0xff]
        %v411 = vld [vmem:[%s392 + $0x80] sm:$0xff]
        %v412 = vld [vmem:[%s392 + $0x88] sm:$0xff]
        %v413 = vld [vmem:[%s392 + $0x90] sm:$0xff]
        %v414 = vld [vmem:[%s392 + $0x98] sm:$0xff]
        %v415 = vld [vmem:[%s392 + $0xa0] sm:$0xff]
        %v416 = vld [vmem:[%s392 + $0xa8] sm:$0xff]
        %v417 = vld [vmem:[%s392 + $0xb0] sm:$0xff]
        %v418 = vld [vmem:[%s392 + $0xb8] sm:$0xff]
        %v419 = vld [vmem:[%s392 + $0xc0] sm:$0xff]
        %v420 = vld [vmem:[%s392 + $0xc8] sm:$0xff]
        %v421 = vld [vmem:[%s392 + $0xd0] sm:$0xff]
        %v422 = vld [vmem:[%s392 + $0xd8] sm:$0xff]
        %v423 = vld [vmem:[%s392 + $0xe0] sm:$0xff]
        %v424 = vld [vmem:[%s392 + $0xe8] sm:$0xff]
        %v425 = vld [vmem:[%s392 + $0xf0] sm:$0xff]
        %v426 = vld [vmem:[%s392 + $0xf8] sm:$0xff]
        %v427 = vld [vmem:[%s392 + $0x100] sm:$0xff]
        %v428 = vld [vmem:[%s392 + $0x108] sm:$0xff]
        %v429 = vld [vmem:[%s392 + $0x110] sm:$0xff]
        %v430 = vld [vmem:[%s392 + $0x118] sm:$0xff]
        %v431 = vld [vmem:[%s392 + $0x120] sm:$0xff]
        %v432 = vld [vmem:[%s392 + $0x128] sm:$0xff]
        %v433 = vld [vmem:[%s392 + $0x130] sm:$0xff]
        %v434 = vld [vmem:[%s392 + $0x138] sm:$0xff]
        %v435 = vld [vmem:[%s392 + $0x140] sm:$0xff]
        %v436 = vld [vmem:[%s392 + $0x148] sm:$0xff]
        %v437 = vld [vmem:[%s392 + $0x150] sm:$0xff]
        %v438 = vld [vmem:[%s392 + $0x158] sm:$0xff]
        %v439 = vld [vmem:[%s392 + $0x160] sm:$0xff]
        %v440 = vld [vmem:[%s392 + $0x168] sm:$0xff]
        %v441 = vld [vmem:[%s392 + $0x170] sm:$0xff]
        %v442 = vld [vmem:[%s392 + $0x178] sm:$0xff]
        %v443 = vld [vmem:[%s392 + $0x180] sm:$0xff]
        %v444 = vld [vmem:[%s392 + $0x188] sm:$0xff]
        %v445 = vld [vmem:[%s392 + $0x190] sm:$0xff]
        %v446 = vld [vmem:[%s392 + $0x198] sm:$0xff]
        %v447 = vld [vmem:[%s392 + $0x1a0] sm:$0xff]
        %v448 = vld [vmem:[%s392 + $0x1a8] sm:$0xff]
        %v449 = vld [vmem:[%s392 + $0x1b0] sm:$0xff]
        %v450 = vld [vmem:[%s392 + $0x1b8] sm:$0xff]
        %v451 = vld [vmem:[%s392 + $0x1c0] sm:$0xff]
        %v452 = vld [vmem:[%s392 + $0x1c8] sm:$0xff]
        %v453 = vld [vmem:[%s392 + $0x1d0] sm:$0xff]
        %v454 = vld [vmem:[%s392 + $0x1d8] sm:$0xff]
        %v455 = vld [vmem:[%s392 + $0x1e0] sm:$0xff]
        %v456 = vld [vmem:[%s392 + $0x1e8] sm:$0xff]
        %v457 = vld [vmem:[%s392 + $0x1f0] sm:$0xff]
        %v458 = vld [vmem:[%s392 + $0x1f8] sm:$0xff]
        %v459 = vld [vmem:[%s392 + $0x200] sm:$0xff]
        %v460 = vld [vmem:[%s392 + $0x208] sm:$0xff]
        %v461 = vld [vmem:[%s392 + $0x210] sm:$0xff]
        %v462 = vld [vmem:[%s392 + $0x218] sm:$0xff]
        %v463 = vld [vmem:[%s392 + $0x220] sm:$0xff]
        %v464 = vld [vmem:[%s392 + $0x228] sm:$0xff]
        %v465 = vld [vmem:[%s392 + $0x230] sm:$0xff]
        %v466 = vld [vmem:[%s392 + $0x238] sm:$0xff]
        %v467 = vld [vmem:[%s392 + $0x240] sm:$0xff]
        %v468 = vld [vmem:[%s392 + $0x248] sm:$0xff]
        %v469 = vld [vmem:[%s392 + $0x250] sm:$0xff]
        %v470 = vld [vmem:[%s392 + $0x258] sm:$0xff]
        %v471 = vld [vmem:[%s392 + $0x260] sm:$0xff]
        %v472 = vld [vmem:[%s392 + $0x268] sm:$0xff]
        %v473 = vld [vmem:[%s392 + $0x270] sm:$0xff]
        %v474 = vld [vmem:[%s392 + $0x278] sm:$0xff]
        %v475 = vld [vmem:[%s392 + $0x280] sm:$0xff]
        %v476 = vld [vmem:[%s392 + $0x288] sm:$0xff]
        %v477 = vld [vmem:[%s392 + $0x290] sm:$0xff]
        %v478 = vld [vmem:[%s392 + $0x298] sm:$0xff]
        %v479 = vld [vmem:[%s392 + $0x2a0] sm:$0xff]
        %v480 = vld [vmem:[%s392 + $0x2a8] sm:$0xff]
        %v481 = vld [vmem:[%s392 + $0x2b0] sm:$0xff]
        %v482 = vld [vmem:[%s392 + $0x2b8] sm:$0xff]
        %v483 = vld [vmem:[%s392 + $0x2c0] sm:$0xff]
        %v484 = vld [vmem:[%s392 + $0x2c8] sm:$0xff]
        %v485 = vld [vmem:[%s392 + $0x2d0] sm:$0xff]
        %v486 = vld [vmem:[%s392 + $0x2d8] sm:$0xff]
        %v487 = vld [vmem:[%s392 + $0x2e0] sm:$0xff]
        %v488 = vld [vmem:[%s392 + $0x2e8] sm:$0xff]
        %v489 = vld [vmem:[%s392 + $0x2f0] sm:$0xff]
        %v490 = vld [vmem:[%s392 + $0x2f8] sm:$0xff]
        %v491 = vld [vmem:[%s355] sm:$0xff]
        %v492 = vld [vmem:[%s355 + $0x8] sm:$0xff]
        %v493 = vld [vmem:[%s355 + $0x10] sm:$0xff]
        %v494 = vld [vmem:[%s355 + $0x18] sm:$0xff]
        %v495 = vld [vmem:[%s355 + $0x20] sm:$0xff]
        %v496 = vld [vmem:[%s355 + $0x28] sm:$0xff]
        %v497 = vld [vmem:[%s355 + $0x30] sm:$0xff]
        %v498 = vld [vmem:[%s355 + $0x38] sm:$0xff]
        %v499 = vld [vmem:[%s355 + $0x40] sm:$0xff]
        %v500 = vld [vmem:[%s355 + $0x48] sm:$0xff]
        %v501 = vld [vmem:[%s355 + $0x50] sm:$0xff]
        %v502 = vld [vmem:[%s355 + $0x58] sm:$0xff]
        %v503 = vld [vmem:[%s355 + $0x60] sm:$0xff]
        %v504 = vld [vmem:[%s355 + $0x68] sm:$0xff]
        %v505 = vld [vmem:[%s355 + $0x70] sm:$0xff]
        %v506 = vld [vmem:[%s355 + $0x78] sm:$0xff]
        %v507 = vld [vmem:[%s355 + $0x80] sm:$0xff]
        %v508 = vld [vmem:[%s355 + $0x88] sm:$0xff]
        %v509 = vld [vmem:[%s355 + $0x90] sm:$0xff]
        %v510 = vld [vmem:[%s355 + $0x98] sm:$0xff]
        %v511 = vld [vmem:[%s355 + $0xa0] sm:$0xff]
        %v512 = vld [vmem:[%s355 + $0xa8] sm:$0xff]
        %v513 = vld [vmem:[%s355 + $0xb0] sm:$0xff]
        %v514 = vld [vmem:[%s355 + $0xb8] sm:$0xff]
        %v515 = vld [vmem:[%s355 + $0xc0] sm:$0xff]
        %v516 = vld [vmem:[%s355 + $0xc8] sm:$0xff]
        %v517 = vld [vmem:[%s355 + $0xd0] sm:$0xff]
        %v518 = vld [vmem:[%s355 + $0xd8] sm:$0xff]
        %v519 = vld [vmem:[%s355 + $0xe0] sm:$0xff]
        %v520 = vld [vmem:[%s355 + $0xe8] sm:$0xff]
        %v521 = vld [vmem:[%s355 + $0xf0] sm:$0xff]
        %v522 = vld [vmem:[%s355 + $0xf8] sm:$0xff]
        %v523 = vld [vmem:[%s355 + $0x100] sm:$0xff]
        %v524 = vld [vmem:[%s355 + $0x108] sm:$0xff]
        %v525 = vld [vmem:[%s355 + $0x110] sm:$0xff]
        %v526 = vld [vmem:[%s355 + $0x118] sm:$0xff]
        %vm527 = vcmask 261120
        %v529 = vsel %vm527, %v397, 0
        %v532 = vsel %vm527, %v400, 0
        %v535 = vsel %vm527, %v403, 0
        %v538 = vsel %vm527, %v406, 0
        %v541 = vsel %vm527, %v409, 0
        %v544 = vsel %vm527, %v412, 0
        %v547 = vsel %vm527, %v415, 0
        %v550 = vsel %vm527, %v418, 0
        %v553 = vsel %vm527, %v421, 0
        %v556 = vsel %vm527, %v424, 0
        %v559 = vsel %vm527, %v427, 0
        %v562 = vsel %vm527, %v430, 0
        %v565 = vsel %vm527, %v433, 0
        %v568 = vsel %vm527, %v436, 0
        %v571 = vsel %vm527, %v439, 0
        %v574 = vsel %vm527, %v442, 0
        %v577 = vsel %vm527, %v445, 0
        %v580 = vsel %vm527, %v448, 0
        %v583 = vsel %vm527, %v451, 0
        %v586 = vsel %vm527, %v454, 0
        %v589 = vsel %vm527, %v457, 0
        %v592 = vsel %vm527, %v460, 0
        %v595 = vsel %vm527, %v463, 0
        %v598 = vsel %vm527, %v466, 0
        %v601 = vsel %vm527, %v469, 0
        %v604 = vsel %vm527, %v472, 0
        %v607 = vsel %vm527, %v475, 0
        %v610 = vsel %vm527, %v478, 0
        %v613 = vsel %vm527, %v481, 0
        %v616 = vsel %vm527, %v484, 0
        %v619 = vsel %vm527, %v487, 0
        %v622 = vsel %vm527, %v490, 0
        %624 = vmatprep.subr.mxu0 0.0
        %625 = vmatpush1.msra.mxu0 %v506
        %626 = vmatprep.subr.mxu0 0.0
        %627 = vmatpush1.msra.mxu0 %v505
        %628 = vmatprep.subr.mxu0 0.0
        %629 = vmatpush1.msra.mxu0 %v504
        %630 = vmatprep.subr.mxu0 0.0
        %631 = vmatpush1.msra.mxu0 %v503
        %632 = vmatprep.subr.mxu0 0.0
        %633 = vmatpush1.msra.mxu0 %v502
        %634 = vmatprep.subr.mxu0 0.0
        %635 = vmatpush1.msra.mxu0 %v501
        %636 = vmatprep.subr.mxu0 0.0
        %637 = vmatpush1.msra.mxu0 %v500
        %638 = vmatprep.subr.mxu0 0.0
        %639 = vmatpush1.msra.mxu0 %v499
        %640 = vmatprep.subr.mxu0 0.0
        %641 = vmatpush1.msra.mxu0 %v498
        %642 = vmatprep.subr.mxu0 0.0
        %643 = vmatpush1.msra.mxu0 %v497
        %644 = vmatprep.subr.mxu0 0.0
        %645 = vmatpush1.msra.mxu0 %v496
        %646 = vmatprep.subr.mxu0 0.0
        %647 = vmatpush1.msra.mxu0 %v495
        %648 = vmatprep.subr.mxu0 0.0
        %649 = vmatpush1.msra.mxu0 %v494
        %650 = vmatprep.subr.mxu0 0.0
        %651 = vmatpush1.msra.mxu0 %v493
        %652 = vmatprep.subr.mxu0 0.0
        %653 = vmatpush1.msra.mxu0 %v492
        %654 = vmatprep.subr.mxu0 0.0
        %655 = vmatpush1.msra.mxu0 %v491
        %656 = vmatprep.subr.mxu0 0.0
        %657 = vmatpush2.msra.mxu0 %v522
        %658 = vmatprep.subr.mxu0 0.0
        %659 = vmatpush2.msra.mxu0 %v521
        %660 = vmatprep.subr.mxu0 0.0
        %661 = vmatpush2.msra.mxu0 %v520
        %662 = vmatprep.subr.mxu0 0.0
        %663 = vmatpush2.msra.mxu0 %v519
        %664 = vmatprep.subr.mxu0 0.0
        %665 = vmatpush2.msra.mxu0 %v518
        %666 = vmatprep.subr.mxu0 0.0
        %667 = vmatpush2.msra.mxu0 %v517
        %668 = vmatprep.subr.mxu0 0.0
        %669 = vmatpush2.msra.mxu0 %v516
        %670 = vmatprep.subr.mxu0 0.0
        %671 = vmatpush2.msra.mxu0 %v515
        %672 = vmatprep.subr.mxu0 0.0
        %673 = vmatpush2.msra.mxu0 %v514
        %674 = vmatprep.subr.mxu0 0.0
        %675 = vmatpush2.msra.mxu0 %v513
        %676 = vmatprep.subr.mxu0 0.0
        %677 = vmatpush2.msra.mxu0 %v512
        %678 = vmatprep.subr.mxu0 0.0
        %679 = vmatpush2.msra.mxu0 %v511
        %680 = vmatprep.subr.mxu0 0.0
        %681 = vmatpush2.msra.mxu0 %v510
        %682 = vmatprep.subr.mxu0 0.0
        %683 = vmatpush2.msra.mxu0 %v509
        %684 = vmatprep.subr.mxu0 0.0
        %685 = vmatpush2.msra.mxu0 %v508
        %686 = vmatprep.subr.mxu0 0.0
        %687 = vmatpush2.msra.mxu0 %v507
        %688 = vmatprep.mubr.f32.mxu0 %v396
        %689 = vmatmul.mubr.f32.gmra.mxu0 %v395
        %v690 = vpop.f32.mrf.mxu0
        %v691 = vadd.f32 0.0, %v690
        %v692 = vpop.f32.mrf.mxu0
        %693 = vmatprep.mubr.f32.mxu0 %v399
        %694 = vmatmul.mubr.f32.gmra.mxu0 %v398
        %v695 = vpop.f32.mrf.mxu0
        %v696 = vadd.f32 0.0, %v695
        %v697 = vpop.f32.mrf.mxu0
        %698 = vmatprep.mubr.f32.mxu0 %v402
        %699 = vmatmul.mubr.f32.gmra.mxu0 %v401
        %v700 = vpop.f32.mrf.mxu0
        %v701 = vadd.f32 0.0, %v700
        %v702 = vpop.f32.mrf.mxu0
        %703 = vmatprep.mubr.f32.mxu0 %v405
        %704 = vmatmul.mubr.f32.gmra.mxu0 %v404
        %v705 = vpop.f32.mrf.mxu0
        %v706 = vadd.f32 0.0, %v705
        %v707 = vpop.f32.mrf.mxu0
        %708 = vmatprep.mubr.f32.mxu0 %v408
        %709 = vmatmul.mubr.f32.gmra.mxu0 %v407
        %v710 = vpop.f32.mrf.mxu0
        %v711 = vadd.f32 0.0, %v710
        %v712 = vpop.f32.mrf.mxu0
        %713 = vmatprep.mubr.f32.mxu0 %v411
        %714 = vmatmul.mubr.f32.gmra.mxu0 %v410
        %v715 = vpop.f32.mrf.mxu0
        %v716 = vadd.f32 0.0, %v715
        %v717 = vpop.f32.mrf.mxu0
        %718 = vmatprep.mubr.f32.mxu0 %v414
        %719 = vmatmul.mubr.f32.gmra.mxu0 %v413
        %v720 = vpop.f32.mrf.mxu0
        %v721 = vadd.f32 0.0, %v720
        %v722 = vpop.f32.mrf.mxu0
        %723 = vmatprep.mubr.f32.mxu0 %v417
        %724 = vmatmul.mubr.f32.gmra.mxu0 %v416
        %v725 = vpop.f32.mrf.mxu0
        %v726 = vadd.f32 0.0, %v725
        %v727 = vpop.f32.mrf.mxu0
        %728 = vmatprep.mubr.f32.mxu0 %v420
        %729 = vmatmul.mubr.f32.gmra.mxu0 %v419
        %v730 = vpop.f32.mrf.mxu0
        %v731 = vadd.f32 0.0, %v730
        %v732 = vpop.f32.mrf.mxu0
        %733 = vmatprep.mubr.f32.mxu0 %v423
        %734 = vmatmul.mubr.f32.gmra.mxu0 %v422
        %v735 = vpop.f32.mrf.mxu0
        %v736 = vadd.f32 0.0, %v735
        %v737 = vpop.f32.mrf.mxu0
        %738 = vmatprep.mubr.f32.mxu0 %v426
        %739 = vmatmul.mubr.f32.gmra.mxu0 %v425
        %v740 = vpop.f32.mrf.mxu0
        %v741 = vadd.f32 0.0, %v740
        %v742 = vpop.f32.mrf.mxu0
        %743 = vmatprep.mubr.f32.mxu0 %v429
        %744 = vmatmul.mubr.f32.gmra.mxu0 %v428
        %v745 = vpop.f32.mrf.mxu0
        %v746 = vadd.f32 0.0, %v745
        %v747 = vpop.f32.mrf.mxu0
        %748 = vmatprep.mubr.f32.mxu0 %v432
        %749 = vmatmul.mubr.f32.gmra.mxu0 %v431
        %v750 = vpop.f32.mrf.mxu0
        %v751 = vadd.f32 0.0, %v750
        %v752 = vpop.f32.mrf.mxu0
        %753 = vmatprep.mubr.f32.mxu0 %v435
        %754 = vmatmul.mubr.f32.gmra.mxu0 %v434
        %v755 = vpop.f32.mrf.mxu0
        %v756 = vadd.f32 0.0, %v755
        %v757 = vpop.f32.mrf.mxu0
        %758 = vmatprep.mubr.f32.mxu0 %v438
        %759 = vmatmul.mubr.f32.gmra.mxu0 %v437
        %v760 = vpop.f32.mrf.mxu0
        %v761 = vadd.f32 0.0, %v760
        %v762 = vpop.f32.mrf.mxu0
        %763 = vmatprep.mubr.f32.mxu0 %v441
        %764 = vmatmul.mubr.f32.gmra.mxu0 %v440
        %v765 = vpop.f32.mrf.mxu0
        %v766 = vadd.f32 0.0, %v765
        %v767 = vpop.f32.mrf.mxu0
        %768 = vmatprep.mubr.f32.mxu0 %v444
        %769 = vmatmul.mubr.f32.gmra.mxu0 %v443
        %v770 = vpop.f32.mrf.mxu0
        %v771 = vadd.f32 0.0, %v770
        %v772 = vpop.f32.mrf.mxu0
        %773 = vmatprep.mubr.f32.mxu0 %v447
        %774 = vmatmul.mubr.f32.gmra.mxu0 %v446
        %v775 = vpop.f32.mrf.mxu0
        %v776 = vadd.f32 0.0, %v775
        %v777 = vpop.f32.mrf.mxu0
        %778 = vmatprep.mubr.f32.mxu0 %v450
        %779 = vmatmul.mubr.f32.gmra.mxu0 %v449
        %v780 = vpop.f32.mrf.mxu0
        %v781 = vadd.f32 0.0, %v780
        %v782 = vpop.f32.mrf.mxu0
        %783 = vmatprep.mubr.f32.mxu0 %v453
        %784 = vmatmul.mubr.f32.gmra.mxu0 %v452
        %v785 = vpop.f32.mrf.mxu0
        %v786 = vadd.f32 0.0, %v785
        %v787 = vpop.f32.mrf.mxu0
        %788 = vmatprep.mubr.f32.mxu0 %v456
        %789 = vmatmul.mubr.f32.gmra.mxu0 %v455
        %v790 = vpop.f32.mrf.mxu0
        %v791 = vadd.f32 0.0, %v790
        %v792 = vpop.f32.mrf.mxu0
        %793 = vmatprep.mubr.f32.mxu0 %v459
        %794 = vmatmul.mubr.f32.gmra.mxu0 %v458
        %v795 = vpop.f32.mrf.mxu0
        %v796 = vadd.f32 0.0, %v795
        %v797 = vpop.f32.mrf.mxu0
        %798 = vmatprep.mubr.f32.mxu0 %v462
        %799 = vmatmul.mubr.f32.gmra.mxu0 %v461
        %v800 = vpop.f32.mrf.mxu0
        %v801 = vadd.f32 0.0, %v800
        %v802 = vpop.f32.mrf.mxu0
        %803 = vmatprep.mubr.f32.mxu0 %v465
        %804 = vmatmul.mubr.f32.gmra.mxu0 %v464
        %v805 = vpop.f32.mrf.mxu0
        %v806 = vadd.f32 0.0, %v805
        %v807 = vpop.f32.mrf.mxu0
        %808 = vmatprep.mubr.f32.mxu0 %v468
        %809 = vmatmul.mubr.f32.gmra.mxu0 %v467
        %v810 = vpop.f32.mrf.mxu0
        %v811 = vadd.f32 0.0, %v810
        %v812 = vpop.f32.mrf.mxu0
        %813 = vmatprep.mubr.f32.mxu0 %v471
        %814 = vmatmul.mubr.f32.gmra.mxu0 %v470
        %v815 = vpop.f32.mrf.mxu0
        %v816 = vadd.f32 0.0, %v815
        %v817 = vpop.f32.mrf.mxu0
        %818 = vmatprep.mubr.f32.mxu0 %v474
        %819 = vmatmul.mubr.f32.gmra.mxu0 %v473
        %v820 = vpop.f32.mrf.mxu0
        %v821 = vadd.f32 0.0, %v820
        %v822 = vpop.f32.mrf.mxu0
        %823 = vmatprep.mubr.f32.mxu0 %v477
        %824 = vmatmul.mubr.f32.gmra.mxu0 %v476
        %v825 = vpop.f32.mrf.mxu0
        %v826 = vadd.f32 0.0, %v825
        %v827 = vpop.f32.mrf.mxu0
        %828 = vmatprep.mubr.f32.mxu0 %v480
        %829 = vmatmul.mubr.f32.gmra.mxu0 %v479
        %v830 = vpop.f32.mrf.mxu0
        %v831 = vadd.f32 0.0, %v830
        %v832 = vpop.f32.mrf.mxu0
        %833 = vmatprep.mubr.f32.mxu0 %v483
        %834 = vmatmul.mubr.f32.gmra.mxu0 %v482
        %v835 = vpop.f32.mrf.mxu0
        %v836 = vadd.f32 0.0, %v835
        %v837 = vpop.f32.mrf.mxu0
        %838 = vmatprep.mubr.f32.mxu0 %v486
        %839 = vmatmul.mubr.f32.gmra.mxu0 %v485
        %v840 = vpop.f32.mrf.mxu0
        %v841 = vadd.f32 0.0, %v840
        %v842 = vpop.f32.mrf.mxu0
        %843 = vmatprep.mubr.f32.mxu0 %v489
        %844 = vmatmul.mubr.f32.gmra.mxu0 %v488
        %v845 = vpop.f32.mrf.mxu0
        %v846 = vadd.f32 0.0, %v845
        %v847 = vpop.f32.mrf.mxu0
        %848 = vdwg.mxu0
        %849 = vmatprep.subr.mxu0 0.0
        %850 = vmatpush1.msra.mxu0 0.0
        %851 = vmatprep.subr.mxu0 0.0
        %852 = vmatpush1.msra.mxu0 0.0
        %853 = vmatprep.subr.mxu0 0.0
        %854 = vmatpush1.msra.mxu0 0.0
        %855 = vmatprep.subr.mxu0 0.0
        %856 = vmatpush1.msra.mxu0 0.0
        %857 = vmatprep.subr.mxu0 0.0
        %858 = vmatpush1.msra.mxu0 0.0
        %859 = vmatprep.subr.mxu0 0.0
        %860 = vmatpush1.msra.mxu0 0.0
        %861 = vmatprep.subr.mxu0 0.0
        %862 = vmatpush1.msra.mxu0 0.0
        %863 = vmatprep.subr.mxu0 0.0
        %864 = vmatpush1.msra.mxu0 0.0
        %865 = vmatprep.subr.mxu0 0.0
        %866 = vmatpush1.msra.mxu0 0.0
        %867 = vmatprep.subr.mxu0 0.0
        %868 = vmatpush1.msra.mxu0 0.0
        %869 = vmatprep.subr.mxu0 0.0
        %870 = vmatpush1.msra.mxu0 0.0
        %871 = vmatprep.subr.mxu0 0.0
        %872 = vmatpush1.msra.mxu0 0.0
        %873 = vmatprep.subr.mxu0 0.0
        %874 = vmatpush1.msra.mxu0 %v526
        %875 = vmatprep.subr.mxu0 0.0
        %876 = vmatpush1.msra.mxu0 %v525
        %877 = vmatprep.subr.mxu0 0.0
        %878 = vmatpush1.msra.mxu0 %v524
        %879 = vmatprep.subr.mxu0 0.0
        %880 = vmatpush1.msra.mxu0 %v523
        %881 = vmatprep.subr.mxu0 0.0
        %882 = vmatpush2.msra.mxu0 0.0
        %883 = vmatprep.subr.mxu0 0.0
        %884 = vmatpush2.msra.mxu0 0.0
        %885 = vmatprep.subr.mxu0 0.0
        %886 = vmatpush2.msra.mxu0 0.0
        %887 = vmatprep.subr.mxu0 0.0
        %888 = vmatpush2.msra.mxu0 0.0
        %889 = vmatprep.subr.mxu0 0.0
        %890 = vmatpush2.msra.mxu0 0.0
        %891 = vmatprep.subr.mxu0 0.0
        %892 = vmatpush2.msra.mxu0 0.0
        %893 = vmatprep.subr.mxu0 0.0
        %894 = vmatpush2.msra.mxu0 0.0
        %895 = vmatprep.subr.mxu0 0.0
        %896 = vmatpush2.msra.mxu0 0.0
        %897 = vmatprep.subr.mxu0 0.0
        %898 = vmatpush2.msra.mxu0 0.0
        %899 = vmatprep.subr.mxu0 0.0
        %900 = vmatpush2.msra.mxu0 0.0
        %901 = vmatprep.subr.mxu0 0.0
        %902 = vmatpush2.msra.mxu0 0.0
        %903 = vmatprep.subr.mxu0 0.0
        %904 = vmatpush2.msra.mxu0 0.0
        %905 = vmatprep.subr.mxu0 0.0
        %906 = vmatpush2.msra.mxu0 0.0
        %907 = vmatprep.subr.mxu0 0.0
        %908 = vmatpush2.msra.mxu0 0.0
        %909 = vmatprep.subr.mxu0 0.0
        %910 = vmatpush2.msra.mxu0 0.0
        %911 = vmatprep.subr.mxu0 0.0
        %912 = vmatpush2.msra.mxu0 0.0
        %913 = vmatprep.mubr.f32.mxu0 0.0
        %914 = vmatmul.mubr.f32.gmra.mxu0 %v529
        %v915 = vpop.f32.mrf.mxu0
        %v916 = vadd.f32 %v691, %v915
        %v917 = vpop.f32.mrf.mxu0
        %918 = vmatprep.mubr.f32.mxu0 0.0
        %919 = vmatmul.mubr.f32.gmra.mxu0 %v532
        %v920 = vpop.f32.mrf.mxu0
        %v921 = vadd.f32 %v696, %v920
        %v922 = vpop.f32.mrf.mxu0
        %923 = vmatprep.mubr.f32.mxu0 0.0
        %924 = vmatmul.mubr.f32.gmra.mxu0 %v535
        %v925 = vpop.f32.mrf.mxu0
        %v926 = vadd.f32 %v701, %v925
        %v927 = vpop.f32.mrf.mxu0
        %928 = vmatprep.mubr.f32.mxu0 0.0
        %929 = vmatmul.mubr.f32.gmra.mxu0 %v538
        %v930 = vpop.f32.mrf.mxu0
        %v931 = vadd.f32 %v706, %v930
        %v932 = vpop.f32.mrf.mxu0
        %933 = vmatprep.mubr.f32.mxu0 0.0
        %934 = vmatmul.mubr.f32.gmra.mxu0 %v541
        %v935 = vpop.f32.mrf.mxu0
        %v936 = vadd.f32 %v711, %v935
        %v937 = vpop.f32.mrf.mxu0
        %938 = vmatprep.mubr.f32.mxu0 0.0
        %939 = vmatmul.mubr.f32.gmra.mxu0 %v544
        %v940 = vpop.f32.mrf.mxu0
        %v941 = vadd.f32 %v716, %v940
        %v942 = vpop.f32.mrf.mxu0
        %943 = vmatprep.mubr.f32.mxu0 0.0
        %944 = vmatmul.mubr.f32.gmra.mxu0 %v547
        %v945 = vpop.f32.mrf.mxu0
        %v946 = vadd.f32 %v721, %v945
        %v947 = vpop.f32.mrf.mxu0
        %948 = vmatprep.mubr.f32.mxu0 0.0
        %949 = vmatmul.mubr.f32.gmra.mxu0 %v550
        %v950 = vpop.f32.mrf.mxu0
        %v951 = vadd.f32 %v726, %v950
        %v952 = vpop.f32.mrf.mxu0
        %953 = vmatprep.mubr.f32.mxu0 0.0
        %954 = vmatmul.mubr.f32.gmra.mxu0 %v553
        %v955 = vpop.f32.mrf.mxu0
        %v956 = vadd.f32 %v731, %v955
        %v957 = vpop.f32.mrf.mxu0
        %958 = vmatprep.mubr.f32.mxu0 0.0
        %959 = vmatmul.mubr.f32.gmra.mxu0 %v556
        %v960 = vpop.f32.mrf.mxu0
        %v961 = vadd.f32 %v736, %v960
        %v962 = vpop.f32.mrf.mxu0
        %963 = vmatprep.mubr.f32.mxu0 0.0
        %964 = vmatmul.mubr.f32.gmra.mxu0 %v559
        %v965 = vpop.f32.mrf.mxu0
        %v966 = vadd.f32 %v741, %v965
        %v967 = vpop.f32.mrf.mxu0
        %968 = vmatprep.mubr.f32.mxu0 0.0
        %969 = vmatmul.mubr.f32.gmra.mxu0 %v562
        %v970 = vpop.f32.mrf.mxu0
        %v971 = vadd.f32 %v746, %v970
        %v972 = vpop.f32.mrf.mxu0
        %973 = vmatprep.mubr.f32.mxu0 0.0
        %974 = vmatmul.mubr.f32.gmra.mxu0 %v565
        %v975 = vpop.f32.mrf.mxu0
        %v976 = vadd.f32 %v751, %v975
        %v977 = vpop.f32.mrf.mxu0
        %978 = vmatprep.mubr.f32.mxu0 0.0
        %979 = vmatmul.mubr.f32.gmra.mxu0 %v568
        %v980 = vpop.f32.mrf.mxu0
        %v981 = vadd.f32 %v756, %v980
        %v982 = vpop.f32.mrf.mxu0
        %983 = vmatprep.mubr.f32.mxu0 0.0
        %984 = vmatmul.mubr.f32.gmra.mxu0 %v571
        %v985 = vpop.f32.mrf.mxu0
        %v986 = vadd.f32 %v761, %v985
        %v987 = vpop.f32.mrf.mxu0
        %988 = vmatprep.mubr.f32.mxu0 0.0
        %989 = vmatmul.mubr.f32.gmra.mxu0 %v574
        %v990 = vpop.f32.mrf.mxu0
        %v991 = vadd.f32 %v766, %v990
        %v992 = vpop.f32.mrf.mxu0
        %993 = vmatprep.mubr.f32.mxu0 0.0
        %994 = vmatmul.mubr.f32.gmra.mxu0 %v577
        %v995 = vpop.f32.mrf.mxu0
        %v996 = vadd.f32 %v771, %v995
        %v997 = vpop.f32.mrf.mxu0
        %998 = vmatprep.mubr.f32.mxu0 0.0
        %999 = vmatmul.mubr.f32.gmra.mxu0 %v580
        %v1000 = vpop.f32.mrf.mxu0
        %v1001 = vadd.f32 %v776, %v1000
        %v1002 = vpop.f32.mrf.mxu0
        %1003 = vmatprep.mubr.f32.mxu0 0.0
        %1004 = vmatmul.mubr.f32.gmra.mxu0 %v583
        %v1005 = vpop.f32.mrf.mxu0
        %v1006 = vadd.f32 %v781, %v1005
        %v1007 = vpop.f32.mrf.mxu0
        %1008 = vmatprep.mubr.f32.mxu0 0.0
        %1009 = vmatmul.mubr.f32.gmra.mxu0 %v586
        %v1010 = vpop.f32.mrf.mxu0
        %v1011 = vadd.f32 %v786, %v1010
        %v1012 = vpop.f32.mrf.mxu0
        %1013 = vmatprep.mubr.f32.mxu0 0.0
        %1014 = vmatmul.mubr.f32.gmra.mxu0 %v589
        %v1015 = vpop.f32.mrf.mxu0
        %v1016 = vadd.f32 %v791, %v1015
        %v1017 = vpop.f32.mrf.mxu0
        %1018 = vmatprep.mubr.f32.mxu0 0.0
        %1019 = vmatmul.mubr.f32.gmra.mxu0 %v592
        %v1020 = vpop.f32.mrf.mxu0
        %v1021 = vadd.f32 %v796, %v1020
        %v1022 = vpop.f32.mrf.mxu0
        %1023 = vmatprep.mubr.f32.mxu0 0.0
        %1024 = vmatmul.mubr.f32.gmra.mxu0 %v595
        %v1025 = vpop.f32.mrf.mxu0
        %v1026 = vadd.f32 %v801, %v1025
        %v1027 = vpop.f32.mrf.mxu0
        %1028 = vmatprep.mubr.f32.mxu0 0.0
        %1029 = vmatmul.mubr.f32.gmra.mxu0 %v598
        %v1030 = vpop.f32.mrf.mxu0
        %v1031 = vadd.f32 %v806, %v1030
        %v1032 = vpop.f32.mrf.mxu0
        %1033 = vmatprep.mubr.f32.mxu0 0.0
        %1034 = vmatmul.mubr.f32.gmra.mxu0 %v601
        %v1035 = vpop.f32.mrf.mxu0
        %v1036 = vadd.f32 %v811, %v1035
        %v1037 = vpop.f32.mrf.mxu0
        %1038 = vmatprep.mubr.f32.mxu0 0.0
        %1039 = vmatmul.mubr.f32.gmra.mxu0 %v604
        %v1040 = vpop.f32.mrf.mxu0
        %v1041 = vadd.f32 %v816, %v1040
        %v1042 = vpop.f32.mrf.mxu0
        %1043 = vmatprep.mubr.f32.mxu0 0.0
        %1044 = vmatmul.mubr.f32.gmra.mxu0 %v607
        %v1045 = vpop.f32.mrf.mxu0
        %v1046 = vadd.f32 %v821, %v1045
        %v1047 = vpop.f32.mrf.mxu0
        %1048 = vmatprep.mubr.f32.mxu0 0.0
        %1049 = vmatmul.mubr.f32.gmra.mxu0 %v610
        %v1050 = vpop.f32.mrf.mxu0
        %v1051 = vadd.f32 %v826, %v1050
        %v1052 = vpop.f32.mrf.mxu0
        %1053 = vmatprep.mubr.f32.mxu0 0.0
        %1054 = vmatmul.mubr.f32.gmra.mxu0 %v613
        %v1055 = vpop.f32.mrf.mxu0
        %v1056 = vadd.f32 %v831, %v1055
        %v1057 = vpop.f32.mrf.mxu0
        %1058 = vmatprep.mubr.f32.mxu0 0.0
        %1059 = vmatmul.mubr.f32.gmra.mxu0 %v616
        %v1060 = vpop.f32.mrf.mxu0
        %v1061 = vadd.f32 %v836, %v1060
        %v1062 = vpop.f32.mrf.mxu0
        %1063 = vmatprep.mubr.f32.mxu0 0.0
        %1064 = vmatmul.mubr.f32.gmra.mxu0 %v619
        %v1065 = vpop.f32.mrf.mxu0
        %v1066 = vadd.f32 %v841, %v1065
        %v1067 = vpop.f32.mrf.mxu0
        %1068 = vmatprep.mubr.f32.mxu0 0.0
        %1069 = vmatmul.mubr.f32.gmra.mxu0 %v622
        %v1070 = vpop.f32.mrf.mxu0
        %v1071 = vadd.f32 %v846, %v1070
        %v1072 = vpop.f32.mrf.mxu0
        %1073 = vdwg.mxu0
        %1074 = vst [vmem:[%s379] sm:$0xff] %v916
        %1075 = vst [vmem:[%s379 + $0x8] sm:$0xff] %v921
        %1076 = vst [vmem:[%s379 + $0x10] sm:$0xff] %v926
        %1077 = vst [vmem:[%s379 + $0x18] sm:$0xff] %v931
        %1078 = vst [vmem:[%s379 + $0x20] sm:$0xff] %v936
        %1079 = vst [vmem:[%s379 + $0x28] sm:$0xff] %v941
        %1080 = vst [vmem:[%s379 + $0x30] sm:$0xff] %v946
        %1081 = vst [vmem:[%s379 + $0x38] sm:$0xff] %v951
        %1082 = vst [vmem:[%s379 + $0x40] sm:$0xff] %v956
        %1083 = vst [vmem:[%s379 + $0x48] sm:$0xff] %v961
        %1084 = vst [vmem:[%s379 + $0x50] sm:$0xff] %v966
        %1085 = vst [vmem:[%s379 + $0x58] sm:$0xff] %v971
        %1086 = vst [vmem:[%s379 + $0x60] sm:$0xff] %v976
        %1087 = vst [vmem:[%s379 + $0x68] sm:$0xff] %v981
        %1088 = vst [vmem:[%s379 + $0x70] sm:$0xff] %v986
        %1089 = vst [vmem:[%s379 + $0x78] sm:$0xff] %v991
        %1090 = vst [vmem:[%s379 + $0x80] sm:$0xff] %v996
        %1091 = vst [vmem:[%s379 + $0x88] sm:$0xff] %v1001
        %1092 = vst [vmem:[%s379 + $0x90] sm:$0xff] %v1006
        %1093 = vst [vmem:[%s379 + $0x98] sm:$0xff] %v1011
        %1094 = vst [vmem:[%s379 + $0xa0] sm:$0xff] %v1016
        %1095 = vst [vmem:[%s379 + $0xa8] sm:$0xff] %v1021
        %1096 = vst [vmem:[%s379 + $0xb0] sm:$0xff] %v1026
        %1097 = vst [vmem:[%s379 + $0xb8] sm:$0xff] %v1031
        %1098 = vst [vmem:[%s379 + $0xc0] sm:$0xff] %v1036
        %1099 = vst [vmem:[%s379 + $0xc8] sm:$0xff] %v1041
        %1100 = vst [vmem:[%s379 + $0xd0] sm:$0xff] %v1046
        %1101 = vst [vmem:[%s379 + $0xd8] sm:$0xff] %v1051
        %1102 = vst [vmem:[%s379 + $0xe0] sm:$0xff] %v1056
        %1103 = vst [vmem:[%s379 + $0xe8] sm:$0xff] %v1061
        %1104 = vst [vmem:[%s379 + $0xf0] sm:$0xff] %v1066
        %1105 = vst [vmem:[%s379 + $0xf8] sm:$0xff] %v1071
        %v1106 = vadd.f32 %v916, %v921
        %v1107 = vadd.f32 %v1106, %v926
        %v1108 = vadd.f32 %v1107, %v931
        %v1109 = vadd.f32 %v1108, %v936
        %v1110 = vadd.f32 %v1109, %v941
        %v1111 = vadd.f32 %v1110, %v946
        %v1112 = vadd.f32 %v1111, %v951
        %v1113 = vadd.f32 %v1112, %v956
        %v1114 = vadd.f32 %v1113, %v961
        %v1115 = vadd.f32 %v1114, %v966
        %v1116 = vadd.f32 %v1115, %v971
        %v1117 = vadd.f32 %v1116, %v976
        %v1118 = vadd.f32 %v1117, %v981
        %v1119 = vadd.f32 %v1118, %v986
        %v1120 = vadd.f32 %v1119, %v991
        %v1121 = vadd.f32 %v1120, %v996
        %v1122 = vadd.f32 %v1121, %v1001
        %v1123 = vadd.f32 %v1122, %v1006
        %v1124 = vadd.f32 %v1123, %v1011
        %v1125 = vadd.f32 %v1124, %v1016
        %v1126 = vadd.f32 %v1125, %v1021
        %v1127 = vadd.f32 %v1126, %v1026
        %v1128 = vadd.f32 %v1127, %v1031
        %v1129 = vadd.f32 %v1128, %v1036
        %v1130 = vadd.f32 %v1129, %v1041
        %v1131 = vadd.f32 %v1130, %v1046
        %v1132 = vadd.f32 %v1131, %v1051
        %v1133 = vadd.f32 %v1132, %v1056
        %v1134 = vadd.f32 %v1133, %v1061
        %v1135 = vadd.f32 %v1134, %v1066
        %v1136 = vadd.f32 %v1135, %v1071
        %v1137 = vrot.slane %v1136, 4
        %v1138 = vadd.f32 %v1136, %v1137
        %v1139 = vrot.slane %v1138, 2
        %v1140 = vadd.f32 %v1138, %v1139
        %v1141 = vrot.slane %v1140, 1
        %v1142 = vadd.f32 %v1140, %v1141
        %v1143 = vmul.f32 %v916, %v916
        %v1144 = vmul.f32 %v921, %v921
        %v1145 = vmul.f32 %v926, %v926
        %v1146 = vmul.f32 %v931, %v931
        %v1147 = vmul.f32 %v936, %v936
        %v1148 = vmul.f32 %v941, %v941
        %v1149 = vmul.f32 %v946, %v946
        %v1150 = vmul.f32 %v951, %v951
        %v1151 = vmul.f32 %v956, %v956
        %v1152 = vmul.f32 %v961, %v961
        %v1153 = vmul.f32 %v966, %v966
        %v1154 = vmul.f32 %v971, %v971
        %v1155 = vmul.f32 %v976, %v976
        %v1156 = vmul.f32 %v981, %v981
        %v1157 = vmul.f32 %v986, %v986
        %v1158 = vmul.f32 %v991, %v991
        %v1159 = vmul.f32 %v996, %v996
        %v1160 = vmul.f32 %v1001, %v1001
        %v1161 = vmul.f32 %v1006, %v1006
        %v1162 = vmul.f32 %v1011, %v1011
        %v1163 = vmul.f32 %v1016, %v1016
        %v1164 = vmul.f32 %v1021, %v1021
        %v1165 = vmul.f32 %v1026, %v1026
        %v1166 = vmul.f32 %v1031, %v1031
        %v1167 = vmul.f32 %v1036, %v1036
        %v1168 = vmul.f32 %v1041, %v1041
        %v1169 = vmul.f32 %v1046, %v1046
        %v1170 = vmul.f32 %v1051, %v1051
        %v1171 = vmul.f32 %v1056, %v1056
        %v1172 = vmul.f32 %v1061, %v1061
        %v1173 = vmul.f32 %v1066, %v1066
        %v1174 = vmul.f32 %v1071, %v1071
        %v1175 = vadd.f32 %v1143, %v1144
        %v1176 = vadd.f32 %v1175, %v1145
        %v1177 = vadd.f32 %v1176, %v1146
        %v1178 = vadd.f32 %v1177, %v1147
        %v1179 = vadd.f32 %v1178, %v1148
        %v1180 = vadd.f32 %v1179, %v1149
        %v1181 = vadd.f32 %v1180, %v1150
        %v1182 = vadd.f32 %v1181, %v1151
        %v1183 = vadd.f32 %v1182, %v1152
        %v1184 = vadd.f32 %v1183, %v1153
        %v1185 = vadd.f32 %v1184, %v1154
        %v1186 = vadd.f32 %v1185, %v1155
        %v1187 = vadd.f32 %v1186, %v1156
        %v1188 = vadd.f32 %v1187, %v1157
        %v1189 = vadd.f32 %v1188, %v1158
        %v1190 = vadd.f32 %v1189, %v1159
        %v1191 = vadd.f32 %v1190, %v1160
        %v1192 = vadd.f32 %v1191, %v1161
        %v1193 = vadd.f32 %v1192, %v1162
        %v1194 = vadd.f32 %v1193, %v1163
        %v1195 = vadd.f32 %v1194, %v1164
        %v1196 = vadd.f32 %v1195, %v1165
        %v1197 = vadd.f32 %v1196, %v1166
        %v1198 = vadd.f32 %v1197, %v1167
        %v1199 = vadd.f32 %v1198, %v1168
        %v1200 = vadd.f32 %v1199, %v1169
        %v1201 = vadd.f32 %v1200, %v1170
        %v1202 = vadd.f32 %v1201, %v1171
        %v1203 = vadd.f32 %v1202, %v1172
        %v1204 = vadd.f32 %v1203, %v1173
        %v1205 = vadd.f32 %v1204, %v1174
        %v1206 = vrot.slane %v1205, 4
        %v1207 = vadd.f32 %v1205, %v1206
        %v1208 = vrot.slane %v1207, 2
        %v1209 = vadd.f32 %v1207, %v1208
        %v1210 = vrot.slane %v1209, 1
        %v1211 = vadd.f32 %v1209, %v1210
        %vm1212 = vcmask 1040384
        %v1213 = vsel %vm1212, %v1142, %v1211
        %p1214 = scmp.eq.s32.totalorder %s26, 0
        // Predicated region
        $region67: #{tpu_custom_call.1} parent=61 // pred_check
          %p1215 = pneg %p1214
        $region68: #{tpu_custom_call.1} parent=61 // pred_check_branch
          %1217 = sbr.rel (%p1215) target = $region70
        $region69: #{tpu_custom_call.1} parent=61 // pred_region
          %1218 = vst [vmem:[%s386] sm:$0x3] %v1213
        $region70: #{tpu_custom_call.1} parent=61 // pred_fallthru
          _
        %p1219 = scmp.ne.s32.totalorder %s26, 0
        // Predicated region
        $region71: #{tpu_custom_call.1} parent=61 // pred_check
          %p1220 = pneg %p1219
        $region72: #{tpu_custom_call.1} parent=61 // pred_check_branch
          %1222 = sbr.rel (%p1220) target = $region74
        $region73: #{tpu_custom_call.1} parent=61 // pred_region
          %v1223 = vld [vmem:[%s386] sm:$0x3]
          %v1224 = vadd.f32 %v1223, %v1213
          %1225 = vst [vmem:[%s386] sm:$0x3] %v1224
        $region74: #{tpu_custom_call.1} parent=61 // pred_fallthru
          _
        %s1226 = sand.u32 %s95, 1
        %s1227 = scalar_lea.sflag [#allocation4], %s1226
        %s1228 = sand.u32 %s95, 1
        %s1229 = smul.addr %s1228, 256
        %s1230 = scalar_lea.vmem [#allocation3], %s1229
        %s1231 = sand.u32 %s121, 1
        %s1232 = scalar_lea.sflag [#allocation6], %s1231
        %s1233 = sand.u32 %s121, 1
        %s1234 = smul.addr %s1233, 2
        %s1235 = scalar_lea.vmem [#allocation5], %s1234
        // Predicated region
        $region75: #{tpu_custom_call.1} parent=61 // pred_check
          %p1236 = pneg %p105
        $region76: #{tpu_custom_call.1} parent=61 // pred_check_branch
          %1238 = sbr.rel (%p1236) target = $region78
        $region77: #{tpu_custom_call.1} parent=61 // pred_region
          %s1239 = smul.u32 32, %s26
          %s1241 = ssub.s32 4096, 4096
          %1242 = vsyncadd %s1227, %s1241
          %s1243 = smul.addr %s1239, 2
          %s1244 = sadd.s32 %s25, %s1243
          %s1245 = smul.addr %s1244, 128
          %s1246 = scalar_lea.hbm %s2, %s1245
          %s1247 = sshll.u32 %s1230, 4
          %s1248 = int_to_ptr.vmem [resolvable:$true] %s1247
          %1253 = dma.vmem_to_hbm [thread:$0]  %s1248, 4096, %s1246, %s1227, 128, 256, 8
        $region78: #{tpu_custom_call.1} parent=61 // pred_fallthru
          _
        // Predicated region
        $region79: #{tpu_custom_call.1} parent=61 // pred_check
          %p1254 = pneg %p131
        $region80: #{tpu_custom_call.1} parent=61 // pred_check_branch
          %1256 = sbr.rel (%p1254) target = $region82
        $region81: #{tpu_custom_call.1} parent=61 // pred_region
          %s1258 = ssub.s32 32, 32
          %1259 = vsyncadd %s1232, %s1258
          %s1260 = smul.addr %s25, 32
          %s1261 = scalar_lea.hbm %s3, %s1260
          %s1263 = sshll.u32 %s1235, 4
          %s1264 = int_to_ptr.vmem [resolvable:$true] %s1263
          %1266 = dma.vmem_to_hbm [thread:$0]  %s1264, 32, %s1261, %s1232
        $region82: #{tpu_custom_call.1} parent=61 // pred_fallthru
          _
      $region62: #{tpu_custom_call.1} parent=5 // pred_fallthru
        _
      %p1267 = scmp.le.s32.totalorder 2, %s16
      // Predicated region
      $region83: #{tpu_custom_call.1} parent=5 // pred_check
        %p1268 = pneg %p1267
      $region84: #{tpu_custom_call.1} parent=5 // pred_check_branch
        %1270 = sbr.rel (%p1268) target = $region86
      $region85: #{tpu_custom_call.1} parent=5 // pred_region
        %s1271 = ssub.s32 %s16, 2
        // Predicated region
        $region87: #{tpu_custom_call.1} parent=85 // pred_check
          %p1272 = pneg %p111
        $region88: #{tpu_custom_call.1} parent=85 // pred_check_branch
          %1274 = sbr.rel (%p1272) target = $region90
        $region89: #{tpu_custom_call.1} parent=85 // pred_region
          %s1275 = sand.u32 %s96, 1
          %s1276 = scalar_lea.sflag [#allocation4], %s1275
          %s1277 = sand.u32 %s96, 1
          %s1278 = smul.addr %s1277, 256
          %s1279 = scalar_lea.vmem [#allocation3], %s1278
          %1280 = dma.done %s1276, 4096
        $region90: #{tpu_custom_call.1} parent=85 // pred_fallthru
          _
        // Predicated region
        $region91: #{tpu_custom_call.1} parent=85 // pred_check
          %p1281 = pneg %p137
        $region92: #{tpu_custom_call.1} parent=85 // pred_check_branch
          %1283 = sbr.rel (%p1281) target = $region94
        $region93: #{tpu_custom_call.1} parent=85 // pred_region
          %s1284 = sand.u32 %s122, 1
          %s1285 = scalar_lea.sflag [#allocation6], %s1284
          %s1286 = sand.u32 %s122, 1
          %s1287 = smul.addr %s1286, 2
          %s1288 = scalar_lea.vmem [#allocation5], %s1287
          %1289 = dma.done %s1285, 32
        $region94: #{tpu_custom_call.1} parent=85 // pred_fallthru
          _
      $region86: #{tpu_custom_call.1} parent=5 // pred_fallthru
        _
    $region6: #{tpu_custom_call.1} parent=1 // loop_footer
      %s20 = sadd.s32 1, %s16
    $region7: #{tpu_custom_call.1} parent=1 // loop_footer_branch
      %15 = sbr.rel target = $region3
    $region8: #{tpu_custom_call.1} parent=1 // loop_exit
      _
    %1290 = vsyncpa [#allocation4], 1
    %s1291 = scalar_lea.sflag [#allocation4], 1
    %1292 = vsyncpa %s1291, 1
    %1293 = vsyncpa [#allocation6], 1
    %s1294 = scalar_lea.sflag [#allocation6], 1
    %1295 = vsyncpa %s1294, 1

</llo_original>
